<compile_context>
chip_gen: v5e
topology: v5e:2x2
jax: 0.10.0
libtpu: 0.0.40
codegen_flags: <defaults>
</compile_context>

<pallas_src>
import functools

import jax
import jax.numpy as jnp
from jax.experimental import pallas as pl
from jax.experimental.pallas import tpu as pltpu

_LANES = 128
_SUBLANES = 8


def _lnexpmax_kernel(x_ref, o_ref, *, alpha, inv_alpha):
    # x_ref: (1, C, TILE_R, 128) VMEM tile, o_ref: (1, TILE_R, 128) VMEM tile.
    x = x_ref[...]
    if x.dtype != jnp.float32:
        # f32 exp + f32 accumulation for bf16/fp16 inputs.
        x = x.astype(jnp.float32)
    eax = jnp.exp(x * alpha)                    # elementwise (VPU/EUP)
    s = jnp.sum(eax, axis=1)                    # reduce over C: dense VPU adds
    # NOTE: matches PyTorch exactly -- no max-subtraction stabilization.
    o_ref[...] = (jnp.log(s) * inv_alpha).astype(o_ref.dtype)


def _round_up(n, m):
    return ((n + m - 1) // m) * m


def lnexp_max(x, alpha=10.0):
    """x: (B, C, H, W) -> y: (B, H, W), y = log(sum(exp(alpha*x), axis=1))/alpha."""
    B, C, H, W = x.shape
    out_dtype = x.dtype
    HW = H * W

    # Lane-dense spatial layout: rows of 128 lanes.
    R = pl.cdiv(HW, _LANES)

    # Tile the spatial rows to fit a conservative VMEM budget (double-buffered
    # input + output blocks).  16 MiB budget leaves headroom even on v7x
    # (64 MiB physical VMEM / 32 MiB scoped) and under v5e's default limit.
    itemsize = jnp.dtype(x.dtype).itemsize
    vmem_budget = 16 * 1024 * 1024
    bytes_per_row = 2 * _LANES * (C * itemsize + itemsize)   # 2x = double buffer
    max_tile_r = max(_SUBLANES,
                     (vmem_budget // bytes_per_row) // _SUBLANES * _SUBLANES)

    if R <= max_tile_r:
        n_tiles = 1
        tile_r = R                      # full-extent block: no 8-divisibility needed
    else:
        n_tiles = pl.cdiv(R, max_tile_r)
        tile_r = _round_up(pl.cdiv(R, n_tiles), _SUBLANES)
    R_pad = n_tiles * tile_r

    # Flatten spatial dims, pad to the lane-dense (R_pad, 128) slab.
    x_flat = x.reshape(B, C, HW)
    pad = R_pad * _LANES - HW
    if pad:
        x_flat = jnp.pad(x_flat, ((0, 0), (0, 0), (0, pad)))
    x_r = x_flat.reshape(B, C, R_pad, _LANES)

    kernel = functools.partial(_lnexpmax_kernel,
                               alpha=float(alpha),
                               inv_alpha=1.0 / float(alpha))

    out = pl.pallas_call(
        kernel,
        out_shape=jax.ShapeDtypeStruct((B, R_pad, _LANES), out_dtype),
        grid=(B, n_tiles),
        in_specs=[pl.BlockSpec((1, C, tile_r, _LANES),
                               lambda b, r: (b, 0, r, 0))],
        out_specs=pl.BlockSpec((1, tile_r, _LANES),
                               lambda b, r: (b, r, 0)),
        compiler_params=pltpu.CompilerParams(
            dimension_semantics=("parallel", "parallel"),
            vmem_limit_bytes=32 * 1024 * 1024),
    )(x_r)

    y = out.reshape(B, R_pad * _LANES)[:, :HW].reshape(B, H, W)
    return y


def _reference(x, alpha):
    return jnp.log(jnp.sum(jnp.exp(x * alpha), axis=1)) / alpha


if __name__ == "__main__":
    key = jax.random.PRNGKey(0)
    alpha = 10.0

    # Main test shape (matches the module's NCHW expectation).
    B, C, H, W = 2, 4, 16, 16
    x = jax.random.normal(key, (B, C, H, W), dtype=jnp.float32)
    y = jax.block_until_ready(lnexp_max(x, alpha=alpha))
    y_ref = _reference(x, alpha)
    assert y.shape == (B, H, W)
    assert jnp.allclose(y, y_ref, rtol=1e-5, atol=1e-5)

    # Ragged spatial size (exercises the lane-padding path).
    x2 = jax.random.normal(jax.random.PRNGKey(1), (2, 4, 7, 9), dtype=jnp.float32)
    y2 = jax.block_until_ready(lnexp_max(x2, alpha=alpha))
    y2_ref = _reference(x2, alpha)
    assert y2.shape == (2, 7, 9)
    assert jnp.allclose(y2, y2_ref, rtol=1e-5, atol=1e-5)

    print("KERNEL_OK")
</pallas_src>

<mosaic_0001>
module attributes {stable_mosaic.version = 11 : i64} {
  func.func @_lnexpmax_kernel(%arg0: i32, %arg1: i32, %arg2: memref<1x4x2x128xf32, #tpu.memory_space<vmem>>, %arg3: memref<1x2x128xf32, #tpu.memory_space<vmem>>) attributes {dimension_semantics = [#tpu.dimension_semantics<parallel>, #tpu.dimension_semantics<parallel>], iteration_bounds = array<i64: 2, 1>, scalar_prefetch = 0 : i64, scratch_operands = 0 : i64, tpu.core_type = #tpu.core_type<tc>, window_params = [{transform_indices = @transform_0, window_bounds = array<i64: 1, 4, 2, 128>}, {transform_indices = @transform_1, window_bounds = array<i64: 1, 2, 128>}]} {
    %c0 = arith.constant 0 : index
    %c0_0 = arith.constant 0 : index
    %c0_1 = arith.constant 0 : index
    %c0_2 = arith.constant 0 : index
    %0 = vector.load %arg2[%c0, %c0_0, %c0_1, %c0_2] : memref<1x4x2x128xf32, #tpu.memory_space<vmem>>, vector<1x4x2x128xf32>
    %cst = arith.constant 1.000000e+01 : f32
    %1 = vector.broadcast %cst : f32 to vector<1x4x2x128xf32>
    %2 = arith.mulf %0, %1 : vector<1x4x2x128xf32>
    %3 = math.exp %2 : vector<1x4x2x128xf32>
    %cst_3 = arith.constant dense<0.000000e+00> : vector<1x2x128xf32>
    %4 = vector.multi_reduction <add>, %3, %cst_3 [1] : vector<1x4x2x128xf32> to vector<1x2x128xf32>
    %5 = math.log %4 : vector<1x2x128xf32>
    %cst_4 = arith.constant 1.000000e-01 : f32
    %6 = vector.broadcast %cst_4 : f32 to vector<1x2x128xf32>
    %7 = arith.mulf %5, %6 : vector<1x2x128xf32>
    %c0_5 = arith.constant 0 : index
    %c0_6 = arith.constant 0 : index
    %c0_7 = arith.constant 0 : index
    %8 = vector.load %arg3[%c0_5, %c0_6, %c0_7] : memref<1x2x128xf32, #tpu.memory_space<vmem>>, vector<1x2x128xf32>
    tpu.vector_store %arg3[%c0_5, %c0_6, %c0_7], %7 {strides = array<i32>} : memref<1x2x128xf32, #tpu.memory_space<vmem>>, vector<1x2x128xf32>,
    return
  }
  func.func @transform_0(%arg0: i32, %arg1: i32) -> (i32, i32, i32, i32) {
    %c0_i32 = arith.constant 0 : i32
    %c0_i32_0 = arith.constant 0 : i32
    %c0_i32_1 = arith.constant 0 : i32
    return %arg0, %c0_i32, %arg1, %c0_i32_0 : i32, i32, i32, i32
  }
  func.func @transform_1(%arg0: i32, %arg1: i32) -> (i32, i32, i32) {
    %c0_i32 = arith.constant 0 : i32
    %c0_i32_0 = arith.constant 0 : i32
    return %arg0, %arg1, %c0_i32 : i32, i32, i32
  }
}

</mosaic_0001>

<llo_original>
// kernel: tpu_custom_call.1
$region0: #{tpu_custom_call.1}
  #allocation0 [shape = 'u32[]', space=smem, size = 0x4, offset = 0x4, fixed_abs, tag = 'smem constant byte address 0x4 - core index']
  #allocation1 [shape = 'u32[72,128]{1,0:T(1,128)}', space=vmem, size = 0x9000, scoped, tag = 'internal scratch']
  %s0 = inlined_call_operand.hbm [shape: f32[2,4,2,128], index: 0, kind: input, shape index: {}]
  %s1 = inlined_call_operand.hbm [shape: f32[2,2,128], index: 1, kind: output, shape index: {}]
  %s2 = sld [smem:[#allocation0]]
  $region41: #{tpu_custom_call.1} parent=0
    _
  %s4 = ssub.s32 1, %s2
  %s5 = scalar_select 0, %s4, %s2
  $region1: #{tpu_custom_call.1} parent=0
    #allocation2 [shape = 'u8[8192]{0}', space=vmem, size = 0x2000, scoped, tag = 'input window, operand 0']
    #allocation3 [shape = 's32[2]{0}', space=sflag, size = 0x8, scoped, tag = 'scoped memory for tpu_custom_call.1']
    #allocation4 [shape = 's32[2]{0}', space=sflag, size = 0x8, scoped, tag = 'scoped memory for tpu_custom_call.1']
    #allocation5 [shape = 'u8[2048]{0}', space=vmem, size = 0x800, scoped, tag = 'output window, operand 0']
    %6 = vsyncpa [#allocation3], 0
    %s7 = scalar_lea.sflag [#allocation3], 1
    %8 = vsyncpa %s7, 0
    %9 = vsyncpa [#allocation4], 0
    %s10 = scalar_lea.sflag [#allocation4], 1
    %11 = vsyncpa %s10, 0
    loop: start=0, step=1, limit=4
    $region2: #{tpu_custom_call.1} parent=1 // loop_pre_header
      _
    $region3: #{tpu_custom_call.1} parent=1 // loop_header
      %s13 = sphi 0, %s17
      %p14 = scmp.ge.s32.totalorder %s13, 4
      %s20 = sphi 0, %s32
      %s21 = sphi 0, %s28
      %s22 = sphi 0, %s20
      %s23 = sphi 0, %s21
      %s24 = sphi 0, %s22
      %s25 = sphi 0, %s23
      %s37 = sphi 0, %s39
      %s40 = sphi 0, %s37
      %s41 = sphi 0, %s40
      %s57 = sphi 0, %s41
      %s65 = sphi 0, %s67
      %s68 = sphi 0, %s65
      %s69 = sphi 0, %s68
      %s85 = sphi 0, %s69
    $region4: #{tpu_custom_call.1} parent=1 // loop_header_branch
      %16 = sbr.rel (%p14) target = $region8
    $region5: #{tpu_custom_call.1} parent=1 // loop_body
      %s18 = ssub.s32 %s13, 1
      %s19 = ssub.s32 %s13, 2
      %s26 = sadd.s32 1, %s21
      %p27 = scmp.ge.s32.totalorder %s26, 1
      %s28 = scalar_select %p27, 0, %s26
      %s29 = sadd.s32 1, %s20
      %s30 = scalar_select %p27, %s29, %s20
      %p31 = scmp.ge.s32.totalorder %s30, 2
      %s32 = scalar_select %p31, 0, %s30
      %s33 = ssub.s32 %s20, %s32
      %s34 = ssub.s32 %s21, %s28
      %s35 = sor.u32 %s33, %s34
      %p36 = scmp.eq.s32.totalorder %s35, 0
      %s38 = sadd.s32 %s37, 1
      %s39 = scalar_select %p36, %s37, %s38
      %p42 = pneg %p36
      %p43 = scmp.eq.s32.totalorder %s13, 1
      %p44 = por %p42, %p43
      %p45 = scmp.ne.s32.totalorder %s37, %s40
      %p46 = scmp.eq.s32.totalorder %s13, 0
      %p47 = por %p45, %p46
      %p48 = scmp.ne.s32.totalorder %s37, %s40
      %p49 = scmp.eq.s32.totalorder %s18, 1
      %p50 = por %p48, %p49
      %p51 = scmp.ne.s32.totalorder %s40, %s41
      %p52 = scmp.eq.s32.totalorder %s18, 0
      %p53 = por %p51, %p52
      %p54 = scmp.ne.s32.totalorder %s40, %s41
      %p55 = scmp.eq.s32.totalorder %s19, 1
      %p56 = por %p54, %p55
      %p58 = scmp.ne.s32.totalorder %s41, %s57
      %p59 = scmp.eq.s32.totalorder %s19, 0
      %p60 = por %p58, %p59
      %s61 = ssub.s32 %s20, %s32
      %s62 = ssub.s32 %s21, %s28
      %s63 = sor.u32 %s61, %s62
      %p64 = scmp.eq.s32.totalorder %s63, 0
      %s66 = sadd.s32 %s65, 1
      %s67 = scalar_select %p64, %s65, %s66
      %p70 = pneg %p64
      %p71 = scmp.eq.s32.totalorder %s13, 1
      %p72 = por %p70, %p71
      %p73 = scmp.ne.s32.totalorder %s65, %s68
      %p74 = scmp.eq.s32.totalorder %s13, 0
      %p75 = por %p73, %p74
      %p76 = scmp.ne.s32.totalorder %s65, %s68
      %p77 = scmp.eq.s32.totalorder %s18, 1
      %p78 = por %p76, %p77
      %p79 = scmp.ne.s32.totalorder %s68, %s69
      %p80 = scmp.eq.s32.totalorder %s18, 0
      %p81 = por %p79, %p80
      %p82 = scmp.ne.s32.totalorder %s68, %s69
      %p83 = scmp.eq.s32.totalorder %s19, 1
      %p84 = por %p82, %p83
      %p86 = scmp.ne.s32.totalorder %s69, %s85
      %p87 = scmp.eq.s32.totalorder %s19, 0
      %p88 = por %p86, %p87
      %p89 = scmp.le.s32.totalorder 1, %s13
      %p90 = scmp.lt.s32.totalorder %s13, 3
      %p91 = pnand %p89, %p90
      %p92 = pneg %p91
      // Predicated region
      $region9: #{tpu_custom_call.1} parent=5 // pred_check
        _
      $region10: #{tpu_custom_call.1} parent=5 // pred_check_branch
        %94 = sbr.rel (%p91) target = $region12
      $region11: #{tpu_custom_call.1} parent=5 // pred_region
        %s95 = ssub.s32 %s13, 1
      $region12: #{tpu_custom_call.1} parent=5 // pred_fallthru
        _
      %p96 = scmp.lt.s32.totalorder %s13, 2
      // Predicated region
      $region13: #{tpu_custom_call.1} parent=5 // pred_check
        %p97 = pneg %p96
      $region14: #{tpu_custom_call.1} parent=5 // pred_check_branch
        %99 = sbr.rel (%p97) target = $region16
      $region15: #{tpu_custom_call.1} parent=5 // pred_region
        // Predicated region
        $region17: #{tpu_custom_call.1} parent=15 // pred_check
          %p100 = pneg %p47
        $region18: #{tpu_custom_call.1} parent=15 // pred_check_branch
          %102 = sbr.rel (%p100) target = $region20
        $region19: #{tpu_custom_call.1} parent=15 // pred_region
          %s103 = sand.u32 %s37, 1
          %s104 = scalar_lea.sflag [#allocation3], %s103
          %s105 = sand.u32 %s37, 1
          %s106 = smul.addr %s105, 8
          %s107 = scalar_lea.vmem [#allocation2], %s106
          %109 = vsyncadd %s104, 0
          %s110 = smul.addr %s20, 4
          %s111 = sadd.s32 %s21, %s110
          %s112 = smul.addr %s111, 2
          %s113 = scalar_lea.hbm %s0, %s112
          %s114 = sshll.u32 %s113, 4
          %s115 = int_to_ptr.hbm [resolvable:$true] %s114
          %s116 = sshll.u32 %s107, 4
          %s117 = int_to_ptr.vmem [resolvable:$true] %s116
          %122 = dma.hbm_to_vmem [thread:$0]  %s115, 128, %s117, %s104, 32, 32, 2
        $region20: #{tpu_custom_call.1} parent=15 // pred_fallthru
          _
      $region16: #{tpu_custom_call.1} parent=5 // pred_fallthru
        _
      %p123 = scmp.le.s32.totalorder 1, %s13
      %p124 = scmp.lt.s32.totalorder %s13, 3
      %p125 = pnand %p123, %p124
      %p126 = pneg %p125
      // Predicated region
      $region21: #{tpu_custom_call.1} parent=5 // pred_check
        _
      $region22: #{tpu_custom_call.1} parent=5 // pred_check_branch
        %128 = sbr.rel (%p125) target = $region24
      $region23: #{tpu_custom_call.1} parent=5 // pred_region
        %s129 = ssub.s32 %s13, 1
        %s130 = sand.u32 %s40, 1
        %s131 = scalar_lea.sflag [#allocation3], %s130
        %s132 = sand.u32 %s40, 1
        %s133 = smul.addr %s132, 8
        %s134 = scalar_lea.vmem [#allocation2], %s133
        // Predicated region
        $region25: #{tpu_custom_call.1} parent=23 // pred_check
          %p135 = pneg %p53
        $region26: #{tpu_custom_call.1} parent=23 // pred_check_branch
          %137 = sbr.rel (%p135) target = $region28
        $region27: #{tpu_custom_call.1} parent=23 // pred_region
          %139 = dma.done %s131, 128
        $region28: #{tpu_custom_call.1} parent=23 // pred_fallthru
          _
        %s140 = sand.u32 %s40, 1
        %s141 = scalar_lea.sflag [#allocation3], %s140
        %s142 = sand.u32 %s40, 1
        %s143 = smul.addr %s142, 8
        %s144 = scalar_lea.vmem [#allocation2], %s143
        %p145 = pneg %p53
        %p146 = pneg %p50
        %p147 = pneg %p81
        %p148 = pneg %p78
        %s149 = sand.u32 %s68, 1
        %s150 = scalar_lea.sflag [#allocation4], %s149
        %s151 = sand.u32 %s68, 1
        %s152 = smul.addr %s151, 2
        %s153 = scalar_lea.vmem [#allocation5], %s152
        %v154 = vld [vmem:[%s134] sm:$0x3]
        %v155 = vld [vmem:[%s134 + $0x2] sm:$0x3]
        %v156 = vld [vmem:[%s134 + $0x4] sm:$0x3]
        %v157 = vld [vmem:[%s134 + $0x6] sm:$0x3]
        %v158 = vmul.f32 %v154, 10.0
        %v159 = vmul.f32 %v155, 10.0
        %v160 = vmul.f32 %v156, 10.0
        %v161 = vmul.f32 %v157, 10.0
        %v162 = vmul.f32 %v158, 1.442695
        %v163 = vpow.pop %v162
        %v164 = vmul.f32 %v159, 1.442695
        %v165 = vpow.pop %v164
        %v166 = vmul.f32 %v160, 1.442695
        %v167 = vpow.pop %v166
        %v168 = vmul.f32 %v161, 1.442695
        %v169 = vpow.pop %v168
        %vm170 = vcmask 1041408
        %v171 = vsel %vm170, %v163, 0.0
        %v172 = vsel %vm170, %v165, 0.0
        %v173 = vadd.f32 %v171, %v172
        %v174 = vsel %vm170, %v167, 0.0
        %v175 = vadd.f32 %v173, %v174
        %v176 = vsel %vm170, %v169, 0.0
        %v177 = vadd.f32 %v175, %v176
        %v178 = vlog2.pop %v177
        %v179 = vmul.f32 %v178, 0.6931472
        %v180 = vmul.f32 %v179, 0.1
        %181 = vst [vmem:[%s153] sm:$0x3] %v180
        %s182 = sand.u32 %s68, 1
        %s183 = scalar_lea.sflag [#allocation4], %s182
        %s184 = sand.u32 %s68, 1
        %s185 = smul.addr %s184, 2
        %s186 = scalar_lea.vmem [#allocation5], %s185
        // Predicated region
        $region29: #{tpu_custom_call.1} parent=23 // pred_check
          %p187 = pneg %p78
        $region30: #{tpu_custom_call.1} parent=23 // pred_check_branch
          %189 = sbr.rel (%p187) target = $region32
        $region31: #{tpu_custom_call.1} parent=23 // pred_region
          %191 = vsyncadd %s183, 0
          %s192 = sadd.s32 %s23, %s22
          %s193 = smul.addr %s192, 2
          %s194 = scalar_lea.hbm %s1, %s193
          %s196 = sshll.u32 %s186, 4
          %s197 = int_to_ptr.vmem [resolvable:$true] %s196
          %s198 = sshll.u32 %s194, 4
          %s199 = int_to_ptr.hbm [resolvable:$true] %s198
          %201 = dma.vmem_to_hbm [thread:$0]  %s197, 32, %s199, %s183
        $region32: #{tpu_custom_call.1} parent=23 // pred_fallthru
          _
      $region24: #{tpu_custom_call.1} parent=5 // pred_fallthru
        _
      %p202 = scmp.le.s32.totalorder 2, %s13
      // Predicated region
      $region33: #{tpu_custom_call.1} parent=5 // pred_check
        %p203 = pneg %p202
      $region34: #{tpu_custom_call.1} parent=5 // pred_check_branch
        %205 = sbr.rel (%p203) target = $region36
      $region35: #{tpu_custom_call.1} parent=5 // pred_region
        %s206 = ssub.s32 %s13, 2
        // Predicated region
        $region37: #{tpu_custom_call.1} parent=35 // pred_check
          %p207 = pneg %p84
        $region38: #{tpu_custom_call.1} parent=35 // pred_check_branch
          %209 = sbr.rel (%p207) target = $region40
        $region39: #{tpu_custom_call.1} parent=35 // pred_region
          %s210 = sand.u32 %s69, 1
          %s211 = scalar_lea.sflag [#allocation4], %s210
          %s212 = sand.u32 %s69, 1
          %s213 = smul.addr %s212, 2
          %s214 = scalar_lea.vmem [#allocation5], %s213
          %216 = dma.done %s211, 32
        $region40: #{tpu_custom_call.1} parent=35 // pred_fallthru
          _
      $region36: #{tpu_custom_call.1} parent=5 // pred_fallthru
        _
    $region6: #{tpu_custom_call.1} parent=1 // loop_footer
      %s17 = sadd.s32 1, %s13
    $region7: #{tpu_custom_call.1} parent=1 // loop_footer_branch
      %12 = sbr.rel target = $region3
    $region8: #{tpu_custom_call.1} parent=1 // loop_exit
      _
    %217 = vsyncpa [#allocation3], 1
    %s218 = scalar_lea.sflag [#allocation3], 1
    %219 = vsyncpa %s218, 1
    %220 = vsyncpa [#allocation4], 1
    %s221 = scalar_lea.sflag [#allocation4], 1
    %222 = vsyncpa %s221, 1

</llo_original>
